<compile_context>
chip_gen: v7x
topology: tpu7x:2x2x1
jax: 0.10.0
libtpu: 0.0.40
codegen_flags: <defaults>
</compile_context>

<pallas_src>
import math

import jax
import jax.numpy as jnp
from jax.experimental import pallas as pl
from jax.experimental.pallas import tpu as pltpu


def _softmax_rows_kernel(x_ref, o_ref):
    # (TILE_ROWS, D) tile; softmax over the last (lane) axis.
    x = x_ref[...].astype(jnp.float32)
    m = jnp.max(x, axis=-1, keepdims=True)           # XLU cross-lane reduce
    e = jnp.exp(x - m)                                # EUP
    s = jnp.sum(e, axis=-1, keepdims=True)            # XLU cross-lane reduce
    inv = pl.reciprocal(s, approx=False)               # exact; keeps 1e-5 accuracy
    o_ref[...] = (e * inv).astype(o_ref.dtype)


def _pick_row_tile(n_rows, max_tile=1024):
    # Largest sublane-aligned tile (multiple of 8) that evenly divides n_rows.
    for cand in (1024, 512, 256, 128, 64, 32, 16, 8):
        if cand <= max_tile and cand <= n_rows and n_rows % cand == 0:
            return cand
    # Fallback: full-extent block (always legal regardless of the (8,128) rule).
    return n_rows


def irefx_softmax_epsilon_abs_out_forward(x, *, max_row_tile=1024):
    """Forward of InputRefXSoftmaxEpsilonAbsOuterOutModule (wrapped softmax).

    x: (..., D) logits (e.g. attention scores (B, H, S, S)).
    returns softmax(x, axis=-1) with the same shape/dtype.
    """
    orig_shape = x.shape
    d = orig_shape[-1]
    n_rows = math.prod(orig_shape[:-1]) if len(orig_shape) > 1 else 1
    x2 = x.reshape(n_rows, d)

    tile_rows = _pick_row_tile(n_rows, max_row_tile)
    grid = (n_rows // tile_rows,)

    out2 = pl.pallas_call(
        _softmax_rows_kernel,
        out_shape=jax.ShapeDtypeStruct((n_rows, d), x.dtype),
        grid_spec=pltpu.PrefetchScalarGridSpec(
            num_scalar_prefetch=0,
            grid=grid,
            in_specs=[pl.BlockSpec((tile_rows, d), lambda i: (i, 0))],
            out_specs=pl.BlockSpec((tile_rows, d), lambda i: (i, 0)),
        ),
        compiler_params=pltpu.CompilerParams(
            # Independent row tiles -> megacore-shardable on v7x.
            dimension_semantics=("parallel",),
        ),
    )(x2)
    return out2.reshape(orig_shape)


if __name__ == "__main__":
    # Attention-logit shaped input: batch=2, heads=4, seq=128.
    # Last dim = 128 keeps loads/stores lane-dense; 1024 total rows give a
    # 4-step pipelined grid at TILE_ROWS=256.
    B, H, S = 2, 4, 128
    key = jax.random.PRNGKey(0)
    x = jax.random.normal(key, (B, H, S, S), dtype=jnp.float32) * 3.0

    out = irefx_softmax_epsilon_abs_out_forward(x)
    out = jax.block_until_ready(out)

    # Reference check: forward of the rule wrapper == softmax over the last dim.
    ref = jax.nn.softmax(x, axis=-1)
    assert out.shape == x.shape
    assert jnp.allclose(out, ref, atol=1e-5, rtol=1e-5)
    assert jnp.allclose(jnp.sum(out, axis=-1), 1.0, atol=1e-5)

    print("KERNEL_OK")
</pallas_src>

<mosaic_0001>
module attributes {stable_mosaic.version = 11 : i64} {
  func.func @_softmax_rows_kernel(%arg0: i32, %arg1: memref<1024x128xf32, #tpu.memory_space<vmem>>, %arg2: memref<1024x128xf32, #tpu.memory_space<vmem>>) attributes {dimension_semantics = [#tpu.dimension_semantics<parallel>], iteration_bounds = array<i64: 1>, scalar_prefetch = 0 : i64, scratch_operands = 0 : i64, tpu.core_type = #tpu.core_type<tc>, window_params = [{transform_indices = @transform_0, window_bounds = array<i64: 1024, 128>}, {transform_indices = @transform_1, window_bounds = array<i64: 1024, 128>}]} {
    %c0 = arith.constant 0 : index
    %c0_0 = arith.constant 0 : index
    %0 = vector.load %arg1[%c0, %c0_0] : memref<1024x128xf32, #tpu.memory_space<vmem>>, vector<1024x128xf32>
    %cst = arith.constant dense<0xFF800000> : vector<1024xf32>
    %1 = vector.multi_reduction <maximumf>, %0, %cst [1] : vector<1024x128xf32> to vector<1024xf32>
    %2 = vector.shape_cast %1 : vector<1024xf32> to vector<1024x1xf32>
    %3 = vector.broadcast %2 : vector<1024x1xf32> to vector<1024x128xf32>
    %4 = arith.subf %0, %3 : vector<1024x128xf32>
    %5 = math.exp %4 : vector<1024x128xf32>
    %cst_1 = arith.constant dense<0.000000e+00> : vector<1024xf32>
    %6 = vector.multi_reduction <add>, %5, %cst_1 [1] : vector<1024x128xf32> to vector<1024xf32>
    %7 = vector.shape_cast %6 : vector<1024xf32> to vector<1024x1xf32>
    %8 = tpu.reciprocal %7 : vector<1024x1xf32> -> vector<1024x1xf32>
    %9 = vector.broadcast %8 : vector<1024x1xf32> to vector<1024x128xf32>
    %10 = arith.mulf %5, %9 : vector<1024x128xf32>
    %c0_2 = arith.constant 0 : index
    %c0_3 = arith.constant 0 : index
    %11 = vector.load %arg2[%c0_2, %c0_3] : memref<1024x128xf32, #tpu.memory_space<vmem>>, vector<1024x128xf32>
    tpu.vector_store %arg2[%c0_2, %c0_3], %10 {strides = array<i32>} : memref<1024x128xf32, #tpu.memory_space<vmem>>, vector<1024x128xf32>,
    return
  }
  func.func @transform_0(%arg0: i32) -> (i32, i32) {
    %c0_i32 = arith.constant 0 : i32
    %c0_i32_0 = arith.constant 0 : i32
    return %arg0, %c0_i32 : i32, i32
  }
  func.func @transform_1(%arg0: i32) -> (i32, i32) {
    %c0_i32 = arith.constant 0 : i32
    %c0_i32_0 = arith.constant 0 : i32
    return %arg0, %c0_i32 : i32, i32
  }
}

</mosaic_0001>

<llo_original>
// kernel: tpu_custom_call.1
$region0: #{tpu_custom_call.1}
  #allocation0 [shape = 'u32[]', space=smem, size = 0x4, offset = 0x4, fixed_abs, tag = 'smem constant byte address 0x4 - core index']
  #allocation1 [shape = 'u32[144,128]{1,0:T(1,128)}', space=vmem, size = 0x12000, scoped, tag = 'internal scratch']
  %s0 = inlined_call_operand.hbm [shape: f32[1024,128], index: 0, kind: input, shape index: {}]
  %s1 = inlined_call_operand.hbm [shape: f32[1024,128], index: 1, kind: output, shape index: {}]
  %s2 = sld [smem:[#allocation0]]
  $region18: #{tpu_custom_call.1} parent=0
    _
  %s4 = ssub.s32 1, %s2
  %s5 = scalar_select 0, %s4, %s2
  $region1: #{tpu_custom_call.1} parent=0
    #allocation2 [shape = 'u8[524288]{0}', space=vmem, size = 0x80000, scoped, tag = 'input window, operand 0, single buffered']
    #allocation3 [shape = 's32[1]{0}', space=sflag, size = 0x4, scoped, tag = 'scoped memory for tpu_custom_call.1']
    #allocation4 [shape = 's32[1]{0}', space=sflag, size = 0x4, scoped, tag = 'scoped memory for tpu_custom_call.1']
    #allocation5 [shape = 'u8[524288]{0}', space=vmem, size = 0x80000, scoped, tag = 'output window, operand 0, single buffered']
    %6 = vsyncpa [#allocation3], 0
    %7 = vsyncpa [#allocation4], 0
    // Predicated region
    $region2: #{tpu_custom_call.1} parent=1 // pred_check
      _
    $region3: #{tpu_custom_call.1} parent=1 // pred_check_branch
      %9 = sbr.rel (0) target = $region5
    $region4: #{tpu_custom_call.1} parent=1 // pred_region
      %s11 = ssub.s32 16384, 16384
      %12 = vsyncadd [#allocation3], %s11
      %s13 = sshll.u32 [#allocation2], 4
      %s14 = int_to_ptr.vmem [resolvable:$true] %s13
      %19 = dma.hbm_to_vmem [thread:$0]  %s0, 16384, %s14, [#allocation3], 128, 128, 8
    $region5: #{tpu_custom_call.1} parent=1 // pred_fallthru
      _
    // Predicated region
    $region6: #{tpu_custom_call.1} parent=1 // pred_check
      _
    $region7: #{tpu_custom_call.1} parent=1 // pred_check_branch
      %21 = sbr.rel (0) target = $region9
    $region8: #{tpu_custom_call.1} parent=1 // pred_region
      %22 = dma.done [#allocation3], 16384
    $region9: #{tpu_custom_call.1} parent=1 // pred_fallthru
      _
    %v23 = vld [vmem:[#allocation2] sm:$0xff]
    %v24 = vld [vmem:[#allocation2 + $0x8] sm:$0xff]
    %v25 = vld [vmem:[#allocation2 + $0x10] sm:$0xff]
    %v26 = vld [vmem:[#allocation2 + $0x18] sm:$0xff]
    %v27 = vld [vmem:[#allocation2 + $0x20] sm:$0xff]
    %v28 = vld [vmem:[#allocation2 + $0x28] sm:$0xff]
    %v29 = vld [vmem:[#allocation2 + $0x30] sm:$0xff]
    %v30 = vld [vmem:[#allocation2 + $0x38] sm:$0xff]
    %v31 = vld [vmem:[#allocation2 + $0x40] sm:$0xff]
    %v32 = vld [vmem:[#allocation2 + $0x48] sm:$0xff]
    %v33 = vld [vmem:[#allocation2 + $0x50] sm:$0xff]
    %v34 = vld [vmem:[#allocation2 + $0x58] sm:$0xff]
    %v35 = vld [vmem:[#allocation2 + $0x60] sm:$0xff]
    %v36 = vld [vmem:[#allocation2 + $0x68] sm:$0xff]
    %v37 = vld [vmem:[#allocation2 + $0x70] sm:$0xff]
    %v38 = vld [vmem:[#allocation2 + $0x78] sm:$0xff]
    %v39 = vld [vmem:[#allocation2 + $0x80] sm:$0xff]
    %v40 = vld [vmem:[#allocation2 + $0x88] sm:$0xff]
    %v41 = vld [vmem:[#allocation2 + $0x90] sm:$0xff]
    %v42 = vld [vmem:[#allocation2 + $0x98] sm:$0xff]
    %v43 = vld [vmem:[#allocation2 + $0xa0] sm:$0xff]
    %v44 = vld [vmem:[#allocation2 + $0xa8] sm:$0xff]
    %v45 = vld [vmem:[#allocation2 + $0xb0] sm:$0xff]
    %v46 = vld [vmem:[#allocation2 + $0xb8] sm:$0xff]
    %v47 = vld [vmem:[#allocation2 + $0xc0] sm:$0xff]
    %v48 = vld [vmem:[#allocation2 + $0xc8] sm:$0xff]
    %v49 = vld [vmem:[#allocation2 + $0xd0] sm:$0xff]
    %v50 = vld [vmem:[#allocation2 + $0xd8] sm:$0xff]
    %v51 = vld [vmem:[#allocation2 + $0xe0] sm:$0xff]
    %v52 = vld [vmem:[#allocation2 + $0xe8] sm:$0xff]
    %v53 = vld [vmem:[#allocation2 + $0xf0] sm:$0xff]
    %v54 = vld [vmem:[#allocation2 + $0xf8] sm:$0xff]
    %v55 = vld [vmem:[#allocation2 + $0x100] sm:$0xff]
    %v56 = vld [vmem:[#allocation2 + $0x108] sm:$0xff]
    %v57 = vld [vmem:[#allocation2 + $0x110] sm:$0xff]
    %v58 = vld [vmem:[#allocation2 + $0x118] sm:$0xff]
    %v59 = vld [vmem:[#allocation2 + $0x120] sm:$0xff]
    %v60 = vld [vmem:[#allocation2 + $0x128] sm:$0xff]
    %v61 = vld [vmem:[#allocation2 + $0x130] sm:$0xff]
    %v62 = vld [vmem:[#allocation2 + $0x138] sm:$0xff]
    %v63 = vld [vmem:[#allocation2 + $0x140] sm:$0xff]
    %v64 = vld [vmem:[#allocation2 + $0x148] sm:$0xff]
    %v65 = vld [vmem:[#allocation2 + $0x150] sm:$0xff]
    %v66 = vld [vmem:[#allocation2 + $0x158] sm:$0xff]
    %v67 = vld [vmem:[#allocation2 + $0x160] sm:$0xff]
    %v68 = vld [vmem:[#allocation2 + $0x168] sm:$0xff]
    %v69 = vld [vmem:[#allocation2 + $0x170] sm:$0xff]
    %v70 = vld [vmem:[#allocation2 + $0x178] sm:$0xff]
    %v71 = vld [vmem:[#allocation2 + $0x180] sm:$0xff]
    %v72 = vld [vmem:[#allocation2 + $0x188] sm:$0xff]
    %v73 = vld [vmem:[#allocation2 + $0x190] sm:$0xff]
    %v74 = vld [vmem:[#allocation2 + $0x198] sm:$0xff]
    %v75 = vld [vmem:[#allocation2 + $0x1a0] sm:$0xff]
    %v76 = vld [vmem:[#allocation2 + $0x1a8] sm:$0xff]
    %v77 = vld [vmem:[#allocation2 + $0x1b0] sm:$0xff]
    %v78 = vld [vmem:[#allocation2 + $0x1b8] sm:$0xff]
    %v79 = vld [vmem:[#allocation2 + $0x1c0] sm:$0xff]
    %v80 = vld [vmem:[#allocation2 + $0x1c8] sm:$0xff]
    %v81 = vld [vmem:[#allocation2 + $0x1d0] sm:$0xff]
    %v82 = vld [vmem:[#allocation2 + $0x1d8] sm:$0xff]
    %v83 = vld [vmem:[#allocation2 + $0x1e0] sm:$0xff]
    %v84 = vld [vmem:[#allocation2 + $0x1e8] sm:$0xff]
    %v85 = vld [vmem:[#allocation2 + $0x1f0] sm:$0xff]
    %v86 = vld [vmem:[#allocation2 + $0x1f8] sm:$0xff]
    %v87 = vld [vmem:[#allocation2 + $0x200] sm:$0xff]
    %v88 = vld [vmem:[#allocation2 + $0x208] sm:$0xff]
    %v89 = vld [vmem:[#allocation2 + $0x210] sm:$0xff]
    %v90 = vld [vmem:[#allocation2 + $0x218] sm:$0xff]
    %v91 = vld [vmem:[#allocation2 + $0x220] sm:$0xff]
    %v92 = vld [vmem:[#allocation2 + $0x228] sm:$0xff]
    %v93 = vld [vmem:[#allocation2 + $0x230] sm:$0xff]
    %v94 = vld [vmem:[#allocation2 + $0x238] sm:$0xff]
    %v95 = vld [vmem:[#allocation2 + $0x240] sm:$0xff]
    %v96 = vld [vmem:[#allocation2 + $0x248] sm:$0xff]
    %v97 = vld [vmem:[#allocation2 + $0x250] sm:$0xff]
    %v98 = vld [vmem:[#allocation2 + $0x258] sm:$0xff]
    %v99 = vld [vmem:[#allocation2 + $0x260] sm:$0xff]
    %v100 = vld [vmem:[#allocation2 + $0x268] sm:$0xff]
    %v101 = vld [vmem:[#allocation2 + $0x270] sm:$0xff]
    %v102 = vld [vmem:[#allocation2 + $0x278] sm:$0xff]
    %v103 = vld [vmem:[#allocation2 + $0x280] sm:$0xff]
    %v104 = vld [vmem:[#allocation2 + $0x288] sm:$0xff]
    %v105 = vld [vmem:[#allocation2 + $0x290] sm:$0xff]
    %v106 = vld [vmem:[#allocation2 + $0x298] sm:$0xff]
    %v107 = vld [vmem:[#allocation2 + $0x2a0] sm:$0xff]
    %v108 = vld [vmem:[#allocation2 + $0x2a8] sm:$0xff]
    %v109 = vld [vmem:[#allocation2 + $0x2b0] sm:$0xff]
    %v110 = vld [vmem:[#allocation2 + $0x2b8] sm:$0xff]
    %v111 = vld [vmem:[#allocation2 + $0x2c0] sm:$0xff]
    %v112 = vld [vmem:[#allocation2 + $0x2c8] sm:$0xff]
    %v113 = vld [vmem:[#allocation2 + $0x2d0] sm:$0xff]
    %v114 = vld [vmem:[#allocation2 + $0x2d8] sm:$0xff]
    %v115 = vld [vmem:[#allocation2 + $0x2e0] sm:$0xff]
    %v116 = vld [vmem:[#allocation2 + $0x2e8] sm:$0xff]
    %v117 = vld [vmem:[#allocation2 + $0x2f0] sm:$0xff]
    %v118 = vld [vmem:[#allocation2 + $0x2f8] sm:$0xff]
    %v119 = vld [vmem:[#allocation2 + $0x300] sm:$0xff]
    %v120 = vld [vmem:[#allocation2 + $0x308] sm:$0xff]
    %v121 = vld [vmem:[#allocation2 + $0x310] sm:$0xff]
    %v122 = vld [vmem:[#allocation2 + $0x318] sm:$0xff]
    %v123 = vld [vmem:[#allocation2 + $0x320] sm:$0xff]
    %v124 = vld [vmem:[#allocation2 + $0x328] sm:$0xff]
    %v125 = vld [vmem:[#allocation2 + $0x330] sm:$0xff]
    %v126 = vld [vmem:[#allocation2 + $0x338] sm:$0xff]
    %v127 = vld [vmem:[#allocation2 + $0x340] sm:$0xff]
    %v128 = vld [vmem:[#allocation2 + $0x348] sm:$0xff]
    %v129 = vld [vmem:[#allocation2 + $0x350] sm:$0xff]
    %v130 = vld [vmem:[#allocation2 + $0x358] sm:$0xff]
    %v131 = vld [vmem:[#allocation2 + $0x360] sm:$0xff]
    %v132 = vld [vmem:[#allocation2 + $0x368] sm:$0xff]
    %v133 = vld [vmem:[#allocation2 + $0x370] sm:$0xff]
    %v134 = vld [vmem:[#allocation2 + $0x378] sm:$0xff]
    %v135 = vld [vmem:[#allocation2 + $0x380] sm:$0xff]
    %v136 = vld [vmem:[#allocation2 + $0x388] sm:$0xff]
    %v137 = vld [vmem:[#allocation2 + $0x390] sm:$0xff]
    %v138 = vld [vmem:[#allocation2 + $0x398] sm:$0xff]
    %v139 = vld [vmem:[#allocation2 + $0x3a0] sm:$0xff]
    %v140 = vld [vmem:[#allocation2 + $0x3a8] sm:$0xff]
    %v141 = vld [vmem:[#allocation2 + $0x3b0] sm:$0xff]
    %v142 = vld [vmem:[#allocation2 + $0x3b8] sm:$0xff]
    %v143 = vld [vmem:[#allocation2 + $0x3c0] sm:$0xff]
    %v144 = vld [vmem:[#allocation2 + $0x3c8] sm:$0xff]
    %v145 = vld [vmem:[#allocation2 + $0x3d0] sm:$0xff]
    %v146 = vld [vmem:[#allocation2 + $0x3d8] sm:$0xff]
    %v147 = vld [vmem:[#allocation2 + $0x3e0] sm:$0xff]
    %v148 = vld [vmem:[#allocation2 + $0x3e8] sm:$0xff]
    %v149 = vld [vmem:[#allocation2 + $0x3f0] sm:$0xff]
    %v150 = vld [vmem:[#allocation2 + $0x3f8] sm:$0xff]
    %151 = vmax.xlane.f32.xlu0 %v23
    %v152 = vpop.xlane.xlu0 %151
    %153 = vmax.xlane.f32.xlu0 %v24
    %v154 = vpop.xlane.xlu0 %153
    %155 = vmax.xlane.f32.xlu0 %v25
    %v156 = vpop.xlane.xlu0 %155
    %157 = vmax.xlane.f32.xlu0 %v26
    %v158 = vpop.xlane.xlu0 %157
    %159 = vmax.xlane.f32.xlu0 %v27
    %v160 = vpop.xlane.xlu0 %159
    %161 = vmax.xlane.f32.xlu0 %v28
    %v162 = vpop.xlane.xlu0 %161
    %163 = vmax.xlane.f32.xlu0 %v29
    %v164 = vpop.xlane.xlu0 %163
    %165 = vmax.xlane.f32.xlu0 %v30
    %v166 = vpop.xlane.xlu0 %165
    %167 = vmax.xlane.f32.xlu0 %v31
    %v168 = vpop.xlane.xlu0 %167
    %169 = vmax.xlane.f32.xlu0 %v32
    %v170 = vpop.xlane.xlu0 %169
    %171 = vmax.xlane.f32.xlu0 %v33
    %v172 = vpop.xlane.xlu0 %171
    %173 = vmax.xlane.f32.xlu0 %v34
    %v174 = vpop.xlane.xlu0 %173
    %175 = vmax.xlane.f32.xlu0 %v35
    %v176 = vpop.xlane.xlu0 %175
    %177 = vmax.xlane.f32.xlu0 %v36
    %v178 = vpop.xlane.xlu0 %177
    %179 = vmax.xlane.f32.xlu0 %v37
    %v180 = vpop.xlane.xlu0 %179
    %181 = vmax.xlane.f32.xlu0 %v38
    %v182 = vpop.xlane.xlu0 %181
    %183 = vmax.xlane.f32.xlu0 %v39
    %v184 = vpop.xlane.xlu0 %183
    %185 = vmax.xlane.f32.xlu0 %v40
    %v186 = vpop.xlane.xlu0 %185
    %187 = vmax.xlane.f32.xlu0 %v41
    %v188 = vpop.xlane.xlu0 %187
    %189 = vmax.xlane.f32.xlu0 %v42
    %v190 = vpop.xlane.xlu0 %189
    %191 = vmax.xlane.f32.xlu0 %v43
    %v192 = vpop.xlane.xlu0 %191
    %193 = vmax.xlane.f32.xlu0 %v44
    %v194 = vpop.xlane.xlu0 %193
    %195 = vmax.xlane.f32.xlu0 %v45
    %v196 = vpop.xlane.xlu0 %195
    %197 = vmax.xlane.f32.xlu0 %v46
    %v198 = vpop.xlane.xlu0 %197
    %199 = vmax.xlane.f32.xlu0 %v47
    %v200 = vpop.xlane.xlu0 %199
    %201 = vmax.xlane.f32.xlu0 %v48
    %v202 = vpop.xlane.xlu0 %201
    %203 = vmax.xlane.f32.xlu0 %v49
    %v204 = vpop.xlane.xlu0 %203
    %205 = vmax.xlane.f32.xlu0 %v50
    %v206 = vpop.xlane.xlu0 %205
    %207 = vmax.xlane.f32.xlu0 %v51
    %v208 = vpop.xlane.xlu0 %207
    %209 = vmax.xlane.f32.xlu0 %v52
    %v210 = vpop.xlane.xlu0 %209
    %211 = vmax.xlane.f32.xlu0 %v53
    %v212 = vpop.xlane.xlu0 %211
    %213 = vmax.xlane.f32.xlu0 %v54
    %v214 = vpop.xlane.xlu0 %213
    %215 = vmax.xlane.f32.xlu0 %v55
    %v216 = vpop.xlane.xlu0 %215
    %217 = vmax.xlane.f32.xlu0 %v56
    %v218 = vpop.xlane.xlu0 %217
    %219 = vmax.xlane.f32.xlu0 %v57
    %v220 = vpop.xlane.xlu0 %219
    %221 = vmax.xlane.f32.xlu0 %v58
    %v222 = vpop.xlane.xlu0 %221
    %223 = vmax.xlane.f32.xlu0 %v59
    %v224 = vpop.xlane.xlu0 %223
    %225 = vmax.xlane.f32.xlu0 %v60
    %v226 = vpop.xlane.xlu0 %225
    %227 = vmax.xlane.f32.xlu0 %v61
    %v228 = vpop.xlane.xlu0 %227
    %229 = vmax.xlane.f32.xlu0 %v62
    %v230 = vpop.xlane.xlu0 %229
    %231 = vmax.xlane.f32.xlu0 %v63
    %v232 = vpop.xlane.xlu0 %231
    %233 = vmax.xlane.f32.xlu0 %v64
    %v234 = vpop.xlane.xlu0 %233
    %235 = vmax.xlane.f32.xlu0 %v65
    %v236 = vpop.xlane.xlu0 %235
    %237 = vmax.xlane.f32.xlu0 %v66
    %v238 = vpop.xlane.xlu0 %237
    %239 = vmax.xlane.f32.xlu0 %v67
    %v240 = vpop.xlane.xlu0 %239
    %241 = vmax.xlane.f32.xlu0 %v68
    %v242 = vpop.xlane.xlu0 %241
    %243 = vmax.xlane.f32.xlu0 %v69
    %v244 = vpop.xlane.xlu0 %243
    %245 = vmax.xlane.f32.xlu0 %v70
    %v246 = vpop.xlane.xlu0 %245
    %247 = vmax.xlane.f32.xlu0 %v71
    %v248 = vpop.xlane.xlu0 %247
    %249 = vmax.xlane.f32.xlu0 %v72
    %v250 = vpop.xlane.xlu0 %249
    %251 = vmax.xlane.f32.xlu0 %v73
    %v252 = vpop.xlane.xlu0 %251
    %253 = vmax.xlane.f32.xlu0 %v74
    %v254 = vpop.xlane.xlu0 %253
    %255 = vmax.xlane.f32.xlu0 %v75
    %v256 = vpop.xlane.xlu0 %255
    %257 = vmax.xlane.f32.xlu0 %v76
    %v258 = vpop.xlane.xlu0 %257
    %259 = vmax.xlane.f32.xlu0 %v77
    %v260 = vpop.xlane.xlu0 %259
    %261 = vmax.xlane.f32.xlu0 %v78
    %v262 = vpop.xlane.xlu0 %261
    %263 = vmax.xlane.f32.xlu0 %v79
    %v264 = vpop.xlane.xlu0 %263
    %265 = vmax.xlane.f32.xlu0 %v80
    %v266 = vpop.xlane.xlu0 %265
    %267 = vmax.xlane.f32.xlu0 %v81
    %v268 = vpop.xlane.xlu0 %267
    %269 = vmax.xlane.f32.xlu0 %v82
    %v270 = vpop.xlane.xlu0 %269
    %271 = vmax.xlane.f32.xlu0 %v83
    %v272 = vpop.xlane.xlu0 %271
    %273 = vmax.xlane.f32.xlu0 %v84
    %v274 = vpop.xlane.xlu0 %273
    %275 = vmax.xlane.f32.xlu0 %v85
    %v276 = vpop.xlane.xlu0 %275
    %277 = vmax.xlane.f32.xlu0 %v86
    %v278 = vpop.xlane.xlu0 %277
    %279 = vmax.xlane.f32.xlu0 %v87
    %v280 = vpop.xlane.xlu0 %279
    %281 = vmax.xlane.f32.xlu0 %v88
    %v282 = vpop.xlane.xlu0 %281
    %283 = vmax.xlane.f32.xlu0 %v89
    %v284 = vpop.xlane.xlu0 %283
    %285 = vmax.xlane.f32.xlu0 %v90
    %v286 = vpop.xlane.xlu0 %285
    %287 = vmax.xlane.f32.xlu0 %v91
    %v288 = vpop.xlane.xlu0 %287
    %289 = vmax.xlane.f32.xlu0 %v92
    %v290 = vpop.xlane.xlu0 %289
    %291 = vmax.xlane.f32.xlu0 %v93
    %v292 = vpop.xlane.xlu0 %291
    %293 = vmax.xlane.f32.xlu0 %v94
    %v294 = vpop.xlane.xlu0 %293
    %295 = vmax.xlane.f32.xlu0 %v95
    %v296 = vpop.xlane.xlu0 %295
    %297 = vmax.xlane.f32.xlu0 %v96
    %v298 = vpop.xlane.xlu0 %297
    %299 = vmax.xlane.f32.xlu0 %v97
    %v300 = vpop.xlane.xlu0 %299
    %301 = vmax.xlane.f32.xlu0 %v98
    %v302 = vpop.xlane.xlu0 %301
    %303 = vmax.xlane.f32.xlu0 %v99
    %v304 = vpop.xlane.xlu0 %303
    %305 = vmax.xlane.f32.xlu0 %v100
    %v306 = vpop.xlane.xlu0 %305
    %307 = vmax.xlane.f32.xlu0 %v101
    %v308 = vpop.xlane.xlu0 %307
    %309 = vmax.xlane.f32.xlu0 %v102
    %v310 = vpop.xlane.xlu0 %309
    %311 = vmax.xlane.f32.xlu0 %v103
    %v312 = vpop.xlane.xlu0 %311
    %313 = vmax.xlane.f32.xlu0 %v104
    %v314 = vpop.xlane.xlu0 %313
    %315 = vmax.xlane.f32.xlu0 %v105
    %v316 = vpop.xlane.xlu0 %315
    %317 = vmax.xlane.f32.xlu0 %v106
    %v318 = vpop.xlane.xlu0 %317
    %319 = vmax.xlane.f32.xlu0 %v107
    %v320 = vpop.xlane.xlu0 %319
    %321 = vmax.xlane.f32.xlu0 %v108
    %v322 = vpop.xlane.xlu0 %321
    %323 = vmax.xlane.f32.xlu0 %v109
    %v324 = vpop.xlane.xlu0 %323
    %325 = vmax.xlane.f32.xlu0 %v110
    %v326 = vpop.xlane.xlu0 %325
    %327 = vmax.xlane.f32.xlu0 %v111
    %v328 = vpop.xlane.xlu0 %327
    %329 = vmax.xlane.f32.xlu0 %v112
    %v330 = vpop.xlane.xlu0 %329
    %331 = vmax.xlane.f32.xlu0 %v113
    %v332 = vpop.xlane.xlu0 %331
    %333 = vmax.xlane.f32.xlu0 %v114
    %v334 = vpop.xlane.xlu0 %333
    %335 = vmax.xlane.f32.xlu0 %v115
    %v336 = vpop.xlane.xlu0 %335
    %337 = vmax.xlane.f32.xlu0 %v116
    %v338 = vpop.xlane.xlu0 %337
    %339 = vmax.xlane.f32.xlu0 %v117
    %v340 = vpop.xlane.xlu0 %339
    %341 = vmax.xlane.f32.xlu0 %v118
    %v342 = vpop.xlane.xlu0 %341
    %343 = vmax.xlane.f32.xlu0 %v119
    %v344 = vpop.xlane.xlu0 %343
    %345 = vmax.xlane.f32.xlu0 %v120
    %v346 = vpop.xlane.xlu0 %345
    %347 = vmax.xlane.f32.xlu0 %v121
    %v348 = vpop.xlane.xlu0 %347
    %349 = vmax.xlane.f32.xlu0 %v122
    %v350 = vpop.xlane.xlu0 %349
    %351 = vmax.xlane.f32.xlu0 %v123
    %v352 = vpop.xlane.xlu0 %351
    %353 = vmax.xlane.f32.xlu0 %v124
    %v354 = vpop.xlane.xlu0 %353
    %355 = vmax.xlane.f32.xlu0 %v125
    %v356 = vpop.xlane.xlu0 %355
    %357 = vmax.xlane.f32.xlu0 %v126
    %v358 = vpop.xlane.xlu0 %357
    %359 = vmax.xlane.f32.xlu0 %v127
    %v360 = vpop.xlane.xlu0 %359
    %361 = vmax.xlane.f32.xlu0 %v128
    %v362 = vpop.xlane.xlu0 %361
    %363 = vmax.xlane.f32.xlu0 %v129
    %v364 = vpop.xlane.xlu0 %363
    %365 = vmax.xlane.f32.xlu0 %v130
    %v366 = vpop.xlane.xlu0 %365
    %367 = vmax.xlane.f32.xlu0 %v131
    %v368 = vpop.xlane.xlu0 %367
    %369 = vmax.xlane.f32.xlu0 %v132
    %v370 = vpop.xlane.xlu0 %369
    %371 = vmax.xlane.f32.xlu0 %v133
    %v372 = vpop.xlane.xlu0 %371
    %373 = vmax.xlane.f32.xlu0 %v134
    %v374 = vpop.xlane.xlu0 %373
    %375 = vmax.xlane.f32.xlu0 %v135
    %v376 = vpop.xlane.xlu0 %375
    %377 = vmax.xlane.f32.xlu0 %v136
    %v378 = vpop.xlane.xlu0 %377
    %379 = vmax.xlane.f32.xlu0 %v137
    %v380 = vpop.xlane.xlu0 %379
    %381 = vmax.xlane.f32.xlu0 %v138
    %v382 = vpop.xlane.xlu0 %381
    %383 = vmax.xlane.f32.xlu0 %v139
    %v384 = vpop.xlane.xlu0 %383
    %385 = vmax.xlane.f32.xlu0 %v140
    %v386 = vpop.xlane.xlu0 %385
    %387 = vmax.xlane.f32.xlu0 %v141
    %v388 = vpop.xlane.xlu0 %387
    %389 = vmax.xlane.f32.xlu0 %v142
    %v390 = vpop.xlane.xlu0 %389
    %391 = vmax.xlane.f32.xlu0 %v143
    %v392 = vpop.xlane.xlu0 %391
    %393 = vmax.xlane.f32.xlu0 %v144
    %v394 = vpop.xlane.xlu0 %393
    %395 = vmax.xlane.f32.xlu0 %v145
    %v396 = vpop.xlane.xlu0 %395
    %397 = vmax.xlane.f32.xlu0 %v146
    %v398 = vpop.xlane.xlu0 %397
    %399 = vmax.xlane.f32.xlu0 %v147
    %v400 = vpop.xlane.xlu0 %399
    %401 = vmax.xlane.f32.xlu0 %v148
    %v402 = vpop.xlane.xlu0 %401
    %403 = vmax.xlane.f32.xlu0 %v149
    %v404 = vpop.xlane.xlu0 %403
    %405 = vmax.xlane.f32.xlu0 %v150
    %v406 = vpop.xlane.xlu0 %405
    %v407 = vsub.f32 %v23, %v152
    %v408 = vsub.f32 %v24, %v154
    %v409 = vsub.f32 %v25, %v156
    %v410 = vsub.f32 %v26, %v158
    %v411 = vsub.f32 %v27, %v160
    %v412 = vsub.f32 %v28, %v162
    %v413 = vsub.f32 %v29, %v164
    %v414 = vsub.f32 %v30, %v166
    %v415 = vsub.f32 %v31, %v168
    %v416 = vsub.f32 %v32, %v170
    %v417 = vsub.f32 %v33, %v172
    %v418 = vsub.f32 %v34, %v174
    %v419 = vsub.f32 %v35, %v176
    %v420 = vsub.f32 %v36, %v178
    %v421 = vsub.f32 %v37, %v180
    %v422 = vsub.f32 %v38, %v182
    %v423 = vsub.f32 %v39, %v184
    %v424 = vsub.f32 %v40, %v186
    %v425 = vsub.f32 %v41, %v188
    %v426 = vsub.f32 %v42, %v190
    %v427 = vsub.f32 %v43, %v192
    %v428 = vsub.f32 %v44, %v194
    %v429 = vsub.f32 %v45, %v196
    %v430 = vsub.f32 %v46, %v198
    %v431 = vsub.f32 %v47, %v200
    %v432 = vsub.f32 %v48, %v202
    %v433 = vsub.f32 %v49, %v204
    %v434 = vsub.f32 %v50, %v206
    %v435 = vsub.f32 %v51, %v208
    %v436 = vsub.f32 %v52, %v210
    %v437 = vsub.f32 %v53, %v212
    %v438 = vsub.f32 %v54, %v214
    %v439 = vsub.f32 %v55, %v216
    %v440 = vsub.f32 %v56, %v218
    %v441 = vsub.f32 %v57, %v220
    %v442 = vsub.f32 %v58, %v222
    %v443 = vsub.f32 %v59, %v224
    %v444 = vsub.f32 %v60, %v226
    %v445 = vsub.f32 %v61, %v228
    %v446 = vsub.f32 %v62, %v230
    %v447 = vsub.f32 %v63, %v232
    %v448 = vsub.f32 %v64, %v234
    %v449 = vsub.f32 %v65, %v236
    %v450 = vsub.f32 %v66, %v238
    %v451 = vsub.f32 %v67, %v240
    %v452 = vsub.f32 %v68, %v242
    %v453 = vsub.f32 %v69, %v244
    %v454 = vsub.f32 %v70, %v246
    %v455 = vsub.f32 %v71, %v248
    %v456 = vsub.f32 %v72, %v250
    %v457 = vsub.f32 %v73, %v252
    %v458 = vsub.f32 %v74, %v254
    %v459 = vsub.f32 %v75, %v256
    %v460 = vsub.f32 %v76, %v258
    %v461 = vsub.f32 %v77, %v260
    %v462 = vsub.f32 %v78, %v262
    %v463 = vsub.f32 %v79, %v264
    %v464 = vsub.f32 %v80, %v266
    %v465 = vsub.f32 %v81, %v268
    %v466 = vsub.f32 %v82, %v270
    %v467 = vsub.f32 %v83, %v272
    %v468 = vsub.f32 %v84, %v274
    %v469 = vsub.f32 %v85, %v276
    %v470 = vsub.f32 %v86, %v278
    %v471 = vsub.f32 %v87, %v280
    %v472 = vsub.f32 %v88, %v282
    %v473 = vsub.f32 %v89, %v284
    %v474 = vsub.f32 %v90, %v286
    %v475 = vsub.f32 %v91, %v288
    %v476 = vsub.f32 %v92, %v290
    %v477 = vsub.f32 %v93, %v292
    %v478 = vsub.f32 %v94, %v294
    %v479 = vsub.f32 %v95, %v296
    %v480 = vsub.f32 %v96, %v298
    %v481 = vsub.f32 %v97, %v300
    %v482 = vsub.f32 %v98, %v302
    %v483 = vsub.f32 %v99, %v304
    %v484 = vsub.f32 %v100, %v306
    %v485 = vsub.f32 %v101, %v308
    %v486 = vsub.f32 %v102, %v310
    %v487 = vsub.f32 %v103, %v312
    %v488 = vsub.f32 %v104, %v314
    %v489 = vsub.f32 %v105, %v316
    %v490 = vsub.f32 %v106, %v318
    %v491 = vsub.f32 %v107, %v320
    %v492 = vsub.f32 %v108, %v322
    %v493 = vsub.f32 %v109, %v324
    %v494 = vsub.f32 %v110, %v326
    %v495 = vsub.f32 %v111, %v328
    %v496 = vsub.f32 %v112, %v330
    %v497 = vsub.f32 %v113, %v332
    %v498 = vsub.f32 %v114, %v334
    %v499 = vsub.f32 %v115, %v336
    %v500 = vsub.f32 %v116, %v338
    %v501 = vsub.f32 %v117, %v340
    %v502 = vsub.f32 %v118, %v342
    %v503 = vsub.f32 %v119, %v344
    %v504 = vsub.f32 %v120, %v346
    %v505 = vsub.f32 %v121, %v348
    %v506 = vsub.f32 %v122, %v350
    %v507 = vsub.f32 %v123, %v352
    %v508 = vsub.f32 %v124, %v354
    %v509 = vsub.f32 %v125, %v356
    %v510 = vsub.f32 %v126, %v358
    %v511 = vsub.f32 %v127, %v360
    %v512 = vsub.f32 %v128, %v362
    %v513 = vsub.f32 %v129, %v364
    %v514 = vsub.f32 %v130, %v366
    %v515 = vsub.f32 %v131, %v368
    %v516 = vsub.f32 %v132, %v370
    %v517 = vsub.f32 %v133, %v372
    %v518 = vsub.f32 %v134, %v374
    %v519 = vsub.f32 %v135, %v376
    %v520 = vsub.f32 %v136, %v378
    %v521 = vsub.f32 %v137, %v380
    %v522 = vsub.f32 %v138, %v382
    %v523 = vsub.f32 %v139, %v384
    %v524 = vsub.f32 %v140, %v386
    %v525 = vsub.f32 %v141, %v388
    %v526 = vsub.f32 %v142, %v390
    %v527 = vsub.f32 %v143, %v392
    %v528 = vsub.f32 %v144, %v394
    %v529 = vsub.f32 %v145, %v396
    %v530 = vsub.f32 %v146, %v398
    %v531 = vsub.f32 %v147, %v400
    %v532 = vsub.f32 %v148, %v402
    %v533 = vsub.f32 %v149, %v404
    %v534 = vsub.f32 %v150, %v406
    %v535 = vmul.f32 %v407, 1.442695
    %v536 = vpow.pop %v535
    %v537 = vmul.f32 %v408, 1.442695
    %v538 = vpow.pop %v537
    %v539 = vmul.f32 %v409, 1.442695
    %v540 = vpow.pop %v539
    %v541 = vmul.f32 %v410, 1.442695
    %v542 = vpow.pop %v541
    %v543 = vmul.f32 %v411, 1.442695
    %v544 = vpow.pop %v543
    %v545 = vmul.f32 %v412, 1.442695
    %v546 = vpow.pop %v545
    %v547 = vmul.f32 %v413, 1.442695
    %v548 = vpow.pop %v547
    %v549 = vmul.f32 %v414, 1.442695
    %v550 = vpow.pop %v549
    %v551 = vmul.f32 %v415, 1.442695
    %v552 = vpow.pop %v551
    %v553 = vmul.f32 %v416, 1.442695
    %v554 = vpow.pop %v553
    %v555 = vmul.f32 %v417, 1.442695
    %v556 = vpow.pop %v555
    %v557 = vmul.f32 %v418, 1.442695
    %v558 = vpow.pop %v557
    %v559 = vmul.f32 %v419, 1.442695
    %v560 = vpow.pop %v559
    %v561 = vmul.f32 %v420, 1.442695
    %v562 = vpow.pop %v561
    %v563 = vmul.f32 %v421, 1.442695
    %v564 = vpow.pop %v563
    %v565 = vmul.f32 %v422, 1.442695
    %v566 = vpow.pop %v565
    %v567 = vmul.f32 %v423, 1.442695
    %v568 = vpow.pop %v567
    %v569 = vmul.f32 %v424, 1.442695
    %v570 = vpow.pop %v569
    %v571 = vmul.f32 %v425, 1.442695
    %v572 = vpow.pop %v571
    %v573 = vmul.f32 %v426, 1.442695
    %v574 = vpow.pop %v573
    %v575 = vmul.f32 %v427, 1.442695
    %v576 = vpow.pop %v575
    %v577 = vmul.f32 %v428, 1.442695
    %v578 = vpow.pop %v577
    %v579 = vmul.f32 %v429, 1.442695
    %v580 = vpow.pop %v579
    %v581 = vmul.f32 %v430, 1.442695
    %v582 = vpow.pop %v581
    %v583 = vmul.f32 %v431, 1.442695
    %v584 = vpow.pop %v583
    %v585 = vmul.f32 %v432, 1.442695
    %v586 = vpow.pop %v585
    %v587 = vmul.f32 %v433, 1.442695
    %v588 = vpow.pop %v587
    %v589 = vmul.f32 %v434, 1.442695
    %v590 = vpow.pop %v589
    %v591 = vmul.f32 %v435, 1.442695
    %v592 = vpow.pop %v591
    %v593 = vmul.f32 %v436, 1.442695
    %v594 = vpow.pop %v593
    %v595 = vmul.f32 %v437, 1.442695
    %v596 = vpow.pop %v595
    %v597 = vmul.f32 %v438, 1.442695
    %v598 = vpow.pop %v597
    %v599 = vmul.f32 %v439, 1.442695
    %v600 = vpow.pop %v599
    %v601 = vmul.f32 %v440, 1.442695
    %v602 = vpow.pop %v601
    %v603 = vmul.f32 %v441, 1.442695
    %v604 = vpow.pop %v603
    %v605 = vmul.f32 %v442, 1.442695
    %v606 = vpow.pop %v605
    %v607 = vmul.f32 %v443, 1.442695
    %v608 = vpow.pop %v607
    %v609 = vmul.f32 %v444, 1.442695
    %v610 = vpow.pop %v609
    %v611 = vmul.f32 %v445, 1.442695
    %v612 = vpow.pop %v611
    %v613 = vmul.f32 %v446, 1.442695
    %v614 = vpow.pop %v613
    %v615 = vmul.f32 %v447, 1.442695
    %v616 = vpow.pop %v615
    %v617 = vmul.f32 %v448, 1.442695
    %v618 = vpow.pop %v617
    %v619 = vmul.f32 %v449, 1.442695
    %v620 = vpow.pop %v619
    %v621 = vmul.f32 %v450, 1.442695
    %v622 = vpow.pop %v621
    %v623 = vmul.f32 %v451, 1.442695
    %v624 = vpow.pop %v623
    %v625 = vmul.f32 %v452, 1.442695
    %v626 = vpow.pop %v625
    %v627 = vmul.f32 %v453, 1.442695
    %v628 = vpow.pop %v627
    %v629 = vmul.f32 %v454, 1.442695
    %v630 = vpow.pop %v629
    %v631 = vmul.f32 %v455, 1.442695
    %v632 = vpow.pop %v631
    %v633 = vmul.f32 %v456, 1.442695
    %v634 = vpow.pop %v633
    %v635 = vmul.f32 %v457, 1.442695
    %v636 = vpow.pop %v635
    %v637 = vmul.f32 %v458, 1.442695
    %v638 = vpow.pop %v637
    %v639 = vmul.f32 %v459, 1.442695
    %v640 = vpow.pop %v639
    %v641 = vmul.f32 %v460, 1.442695
    %v642 = vpow.pop %v641
    %v643 = vmul.f32 %v461, 1.442695
    %v644 = vpow.pop %v643
    %v645 = vmul.f32 %v462, 1.442695
    %v646 = vpow.pop %v645
    %v647 = vmul.f32 %v463, 1.442695
    %v648 = vpow.pop %v647
    %v649 = vmul.f32 %v464, 1.442695
    %v650 = vpow.pop %v649
    %v651 = vmul.f32 %v465, 1.442695
    %v652 = vpow.pop %v651
    %v653 = vmul.f32 %v466, 1.442695
    %v654 = vpow.pop %v653
    %v655 = vmul.f32 %v467, 1.442695
    %v656 = vpow.pop %v655
    %v657 = vmul.f32 %v468, 1.442695
    %v658 = vpow.pop %v657
    %v659 = vmul.f32 %v469, 1.442695
    %v660 = vpow.pop %v659
    %v661 = vmul.f32 %v470, 1.442695
    %v662 = vpow.pop %v661
    %v663 = vmul.f32 %v471, 1.442695
    %v664 = vpow.pop %v663
    %v665 = vmul.f32 %v472, 1.442695
    %v666 = vpow.pop %v665
    %v667 = vmul.f32 %v473, 1.442695
    %v668 = vpow.pop %v667
    %v669 = vmul.f32 %v474, 1.442695
    %v670 = vpow.pop %v669
    %v671 = vmul.f32 %v475, 1.442695
    %v672 = vpow.pop %v671
    %v673 = vmul.f32 %v476, 1.442695
    %v674 = vpow.pop %v673
    %v675 = vmul.f32 %v477, 1.442695
    %v676 = vpow.pop %v675
    %v677 = vmul.f32 %v478, 1.442695
    %v678 = vpow.pop %v677
    %v679 = vmul.f32 %v479, 1.442695
    %v680 = vpow.pop %v679
    %v681 = vmul.f32 %v480, 1.442695
    %v682 = vpow.pop %v681
    %v683 = vmul.f32 %v481, 1.442695
    %v684 = vpow.pop %v683
    %v685 = vmul.f32 %v482, 1.442695
    %v686 = vpow.pop %v685
    %v687 = vmul.f32 %v483, 1.442695
    %v688 = vpow.pop %v687
    %v689 = vmul.f32 %v484, 1.442695
    %v690 = vpow.pop %v689
    %v691 = vmul.f32 %v485, 1.442695
    %v692 = vpow.pop %v691
    %v693 = vmul.f32 %v486, 1.442695
    %v694 = vpow.pop %v693
    %v695 = vmul.f32 %v487, 1.442695
    %v696 = vpow.pop %v695
    %v697 = vmul.f32 %v488, 1.442695
    %v698 = vpow.pop %v697
    %v699 = vmul.f32 %v489, 1.442695
    %v700 = vpow.pop %v699
    %v701 = vmul.f32 %v490, 1.442695
    %v702 = vpow.pop %v701
    %v703 = vmul.f32 %v491, 1.442695
    %v704 = vpow.pop %v703
    %v705 = vmul.f32 %v492, 1.442695
    %v706 = vpow.pop %v705
    %v707 = vmul.f32 %v493, 1.442695
    %v708 = vpow.pop %v707
    %v709 = vmul.f32 %v494, 1.442695
    %v710 = vpow.pop %v709
    %v711 = vmul.f32 %v495, 1.442695
    %v712 = vpow.pop %v711
    %v713 = vmul.f32 %v496, 1.442695
    %v714 = vpow.pop %v713
    %v715 = vmul.f32 %v497, 1.442695
    %v716 = vpow.pop %v715
    %v717 = vmul.f32 %v498, 1.442695
    %v718 = vpow.pop %v717
    %v719 = vmul.f32 %v499, 1.442695
    %v720 = vpow.pop %v719
    %v721 = vmul.f32 %v500, 1.442695
    %v722 = vpow.pop %v721
    %v723 = vmul.f32 %v501, 1.442695
    %v724 = vpow.pop %v723
    %v725 = vmul.f32 %v502, 1.442695
    %v726 = vpow.pop %v725
    %v727 = vmul.f32 %v503, 1.442695
    %v728 = vpow.pop %v727
    %v729 = vmul.f32 %v504, 1.442695
    %v730 = vpow.pop %v729
    %v731 = vmul.f32 %v505, 1.442695
    %v732 = vpow.pop %v731
    %v733 = vmul.f32 %v506, 1.442695
    %v734 = vpow.pop %v733
    %v735 = vmul.f32 %v507, 1.442695
    %v736 = vpow.pop %v735
    %v737 = vmul.f32 %v508, 1.442695
    %v738 = vpow.pop %v737
    %v739 = vmul.f32 %v509, 1.442695
    %v740 = vpow.pop %v739
    %v741 = vmul.f32 %v510, 1.442695
    %v742 = vpow.pop %v741
    %v743 = vmul.f32 %v511, 1.442695
    %v744 = vpow.pop %v743
    %v745 = vmul.f32 %v512, 1.442695
    %v746 = vpow.pop %v745
    %v747 = vmul.f32 %v513, 1.442695
    %v748 = vpow.pop %v747
    %v749 = vmul.f32 %v514, 1.442695
    %v750 = vpow.pop %v749
    %v751 = vmul.f32 %v515, 1.442695
    %v752 = vpow.pop %v751
    %v753 = vmul.f32 %v516, 1.442695
    %v754 = vpow.pop %v753
    %v755 = vmul.f32 %v517, 1.442695
    %v756 = vpow.pop %v755
    %v757 = vmul.f32 %v518, 1.442695
    %v758 = vpow.pop %v757
    %v759 = vmul.f32 %v519, 1.442695
    %v760 = vpow.pop %v759
    %v761 = vmul.f32 %v520, 1.442695
    %v762 = vpow.pop %v761
    %v763 = vmul.f32 %v521, 1.442695
    %v764 = vpow.pop %v763
    %v765 = vmul.f32 %v522, 1.442695
    %v766 = vpow.pop %v765
    %v767 = vmul.f32 %v523, 1.442695
    %v768 = vpow.pop %v767
    %v769 = vmul.f32 %v524, 1.442695
    %v770 = vpow.pop %v769
    %v771 = vmul.f32 %v525, 1.442695
    %v772 = vpow.pop %v771
    %v773 = vmul.f32 %v526, 1.442695
    %v774 = vpow.pop %v773
    %v775 = vmul.f32 %v527, 1.442695
    %v776 = vpow.pop %v775
    %v777 = vmul.f32 %v528, 1.442695
    %v778 = vpow.pop %v777
    %v779 = vmul.f32 %v529, 1.442695
    %v780 = vpow.pop %v779
    %v781 = vmul.f32 %v530, 1.442695
    %v782 = vpow.pop %v781
    %v783 = vmul.f32 %v531, 1.442695
    %v784 = vpow.pop %v783
    %v785 = vmul.f32 %v532, 1.442695
    %v786 = vpow.pop %v785
    %v787 = vmul.f32 %v533, 1.442695
    %v788 = vpow.pop %v787
    %v789 = vmul.f32 %v534, 1.442695
    %v790 = vpow.pop %v789
    %791 = vadd.xlane.f32.xlu0 %v536
    %v792 = vpop.xlane.xlu0 %791
    %793 = vadd.xlane.f32.xlu0 %v538
    %v794 = vpop.xlane.xlu0 %793
    %795 = vadd.xlane.f32.xlu0 %v540
    %v796 = vpop.xlane.xlu0 %795
    %797 = vadd.xlane.f32.xlu0 %v542
    %v798 = vpop.xlane.xlu0 %797
    %799 = vadd.xlane.f32.xlu0 %v544
    %v800 = vpop.xlane.xlu0 %799
    %801 = vadd.xlane.f32.xlu0 %v546
    %v802 = vpop.xlane.xlu0 %801
    %803 = vadd.xlane.f32.xlu0 %v548
    %v804 = vpop.xlane.xlu0 %803
    %805 = vadd.xlane.f32.xlu0 %v550
    %v806 = vpop.xlane.xlu0 %805
    %807 = vadd.xlane.f32.xlu0 %v552
    %v808 = vpop.xlane.xlu0 %807
    %809 = vadd.xlane.f32.xlu0 %v554
    %v810 = vpop.xlane.xlu0 %809
    %811 = vadd.xlane.f32.xlu0 %v556
    %v812 = vpop.xlane.xlu0 %811
    %813 = vadd.xlane.f32.xlu0 %v558
    %v814 = vpop.xlane.xlu0 %813
    %815 = vadd.xlane.f32.xlu0 %v560
    %v816 = vpop.xlane.xlu0 %815
    %817 = vadd.xlane.f32.xlu0 %v562
    %v818 = vpop.xlane.xlu0 %817
    %819 = vadd.xlane.f32.xlu0 %v564
    %v820 = vpop.xlane.xlu0 %819
    %821 = vadd.xlane.f32.xlu0 %v566
    %v822 = vpop.xlane.xlu0 %821
    %823 = vadd.xlane.f32.xlu0 %v568
    %v824 = vpop.xlane.xlu0 %823
    %825 = vadd.xlane.f32.xlu0 %v570
    %v826 = vpop.xlane.xlu0 %825
    %827 = vadd.xlane.f32.xlu0 %v572
    %v828 = vpop.xlane.xlu0 %827
    %829 = vadd.xlane.f32.xlu0 %v574
    %v830 = vpop.xlane.xlu0 %829
    %831 = vadd.xlane.f32.xlu0 %v576
    %v832 = vpop.xlane.xlu0 %831
    %833 = vadd.xlane.f32.xlu0 %v578
    %v834 = vpop.xlane.xlu0 %833
    %835 = vadd.xlane.f32.xlu0 %v580
    %v836 = vpop.xlane.xlu0 %835
    %837 = vadd.xlane.f32.xlu0 %v582
    %v838 = vpop.xlane.xlu0 %837
    %839 = vadd.xlane.f32.xlu0 %v584
    %v840 = vpop.xlane.xlu0 %839
    %841 = vadd.xlane.f32.xlu0 %v586
    %v842 = vpop.xlane.xlu0 %841
    %843 = vadd.xlane.f32.xlu0 %v588
    %v844 = vpop.xlane.xlu0 %843
    %845 = vadd.xlane.f32.xlu0 %v590
    %v846 = vpop.xlane.xlu0 %845
    %847 = vadd.xlane.f32.xlu0 %v592
    %v848 = vpop.xlane.xlu0 %847
    %849 = vadd.xlane.f32.xlu0 %v594
    %v850 = vpop.xlane.xlu0 %849
    %851 = vadd.xlane.f32.xlu0 %v596
    %v852 = vpop.xlane.xlu0 %851
    %853 = vadd.xlane.f32.xlu0 %v598
    %v854 = vpop.xlane.xlu0 %853
    %855 = vadd.xlane.f32.xlu0 %v600
    %v856 = vpop.xlane.xlu0 %855
    %857 = vadd.xlane.f32.xlu0 %v602
    %v858 = vpop.xlane.xlu0 %857
    %859 = vadd.xlane.f32.xlu0 %v604
    %v860 = vpop.xlane.xlu0 %859
    %861 = vadd.xlane.f32.xlu0 %v606
    %v862 = vpop.xlane.xlu0 %861
    %863 = vadd.xlane.f32.xlu0 %v608
    %v864 = vpop.xlane.xlu0 %863
    %865 = vadd.xlane.f32.xlu0 %v610
    %v866 = vpop.xlane.xlu0 %865
    %867 = vadd.xlane.f32.xlu0 %v612
    %v868 = vpop.xlane.xlu0 %867
    %869 = vadd.xlane.f32.xlu0 %v614
    %v870 = vpop.xlane.xlu0 %869
    %871 = vadd.xlane.f32.xlu0 %v616
    %v872 = vpop.xlane.xlu0 %871
    %873 = vadd.xlane.f32.xlu0 %v618
    %v874 = vpop.xlane.xlu0 %873
    %875 = vadd.xlane.f32.xlu0 %v620
    %v876 = vpop.xlane.xlu0 %875
    %877 = vadd.xlane.f32.xlu0 %v622
    %v878 = vpop.xlane.xlu0 %877
    %879 = vadd.xlane.f32.xlu0 %v624
    %v880 = vpop.xlane.xlu0 %879
    %881 = vadd.xlane.f32.xlu0 %v626
    %v882 = vpop.xlane.xlu0 %881
    %883 = vadd.xlane.f32.xlu0 %v628
    %v884 = vpop.xlane.xlu0 %883
    %885 = vadd.xlane.f32.xlu0 %v630
    %v886 = vpop.xlane.xlu0 %885
    %887 = vadd.xlane.f32.xlu0 %v632
    %v888 = vpop.xlane.xlu0 %887
    %889 = vadd.xlane.f32.xlu0 %v634
    %v890 = vpop.xlane.xlu0 %889
    %891 = vadd.xlane.f32.xlu0 %v636
    %v892 = vpop.xlane.xlu0 %891
    %893 = vadd.xlane.f32.xlu0 %v638
    %v894 = vpop.xlane.xlu0 %893
    %895 = vadd.xlane.f32.xlu0 %v640
    %v896 = vpop.xlane.xlu0 %895
    %897 = vadd.xlane.f32.xlu0 %v642
    %v898 = vpop.xlane.xlu0 %897
    %899 = vadd.xlane.f32.xlu0 %v644
    %v900 = vpop.xlane.xlu0 %899
    %901 = vadd.xlane.f32.xlu0 %v646
    %v902 = vpop.xlane.xlu0 %901
    %903 = vadd.xlane.f32.xlu0 %v648
    %v904 = vpop.xlane.xlu0 %903
    %905 = vadd.xlane.f32.xlu0 %v650
    %v906 = vpop.xlane.xlu0 %905
    %907 = vadd.xlane.f32.xlu0 %v652
    %v908 = vpop.xlane.xlu0 %907
    %909 = vadd.xlane.f32.xlu0 %v654
    %v910 = vpop.xlane.xlu0 %909
    %911 = vadd.xlane.f32.xlu0 %v656
    %v912 = vpop.xlane.xlu0 %911
    %913 = vadd.xlane.f32.xlu0 %v658
    %v914 = vpop.xlane.xlu0 %913
    %915 = vadd.xlane.f32.xlu0 %v660
    %v916 = vpop.xlane.xlu0 %915
    %917 = vadd.xlane.f32.xlu0 %v662
    %v918 = vpop.xlane.xlu0 %917
    %919 = vadd.xlane.f32.xlu0 %v664
    %v920 = vpop.xlane.xlu0 %919
    %921 = vadd.xlane.f32.xlu0 %v666
    %v922 = vpop.xlane.xlu0 %921
    %923 = vadd.xlane.f32.xlu0 %v668
    %v924 = vpop.xlane.xlu0 %923
    %925 = vadd.xlane.f32.xlu0 %v670
    %v926 = vpop.xlane.xlu0 %925
    %927 = vadd.xlane.f32.xlu0 %v672
    %v928 = vpop.xlane.xlu0 %927
    %929 = vadd.xlane.f32.xlu0 %v674
    %v930 = vpop.xlane.xlu0 %929
    %931 = vadd.xlane.f32.xlu0 %v676
    %v932 = vpop.xlane.xlu0 %931
    %933 = vadd.xlane.f32.xlu0 %v678
    %v934 = vpop.xlane.xlu0 %933
    %935 = vadd.xlane.f32.xlu0 %v680
    %v936 = vpop.xlane.xlu0 %935
    %937 = vadd.xlane.f32.xlu0 %v682
    %v938 = vpop.xlane.xlu0 %937
    %939 = vadd.xlane.f32.xlu0 %v684
    %v940 = vpop.xlane.xlu0 %939
    %941 = vadd.xlane.f32.xlu0 %v686
    %v942 = vpop.xlane.xlu0 %941
    %943 = vadd.xlane.f32.xlu0 %v688
    %v944 = vpop.xlane.xlu0 %943
    %945 = vadd.xlane.f32.xlu0 %v690
    %v946 = vpop.xlane.xlu0 %945
    %947 = vadd.xlane.f32.xlu0 %v692
    %v948 = vpop.xlane.xlu0 %947
    %949 = vadd.xlane.f32.xlu0 %v694
    %v950 = vpop.xlane.xlu0 %949
    %951 = vadd.xlane.f32.xlu0 %v696
    %v952 = vpop.xlane.xlu0 %951
    %953 = vadd.xlane.f32.xlu0 %v698
    %v954 = vpop.xlane.xlu0 %953
    %955 = vadd.xlane.f32.xlu0 %v700
    %v956 = vpop.xlane.xlu0 %955
    %957 = vadd.xlane.f32.xlu0 %v702
    %v958 = vpop.xlane.xlu0 %957
    %959 = vadd.xlane.f32.xlu0 %v704
    %v960 = vpop.xlane.xlu0 %959
    %961 = vadd.xlane.f32.xlu0 %v706
    %v962 = vpop.xlane.xlu0 %961
    %963 = vadd.xlane.f32.xlu0 %v708
    %v964 = vpop.xlane.xlu0 %963
    %965 = vadd.xlane.f32.xlu0 %v710
    %v966 = vpop.xlane.xlu0 %965
    %967 = vadd.xlane.f32.xlu0 %v712
    %v968 = vpop.xlane.xlu0 %967
    %969 = vadd.xlane.f32.xlu0 %v714
    %v970 = vpop.xlane.xlu0 %969
    %971 = vadd.xlane.f32.xlu0 %v716
    %v972 = vpop.xlane.xlu0 %971
    %973 = vadd.xlane.f32.xlu0 %v718
    %v974 = vpop.xlane.xlu0 %973
    %975 = vadd.xlane.f32.xlu0 %v720
    %v976 = vpop.xlane.xlu0 %975
    %977 = vadd.xlane.f32.xlu0 %v722
    %v978 = vpop.xlane.xlu0 %977
    %979 = vadd.xlane.f32.xlu0 %v724
    %v980 = vpop.xlane.xlu0 %979
    %981 = vadd.xlane.f32.xlu0 %v726
    %v982 = vpop.xlane.xlu0 %981
    %983 = vadd.xlane.f32.xlu0 %v728
    %v984 = vpop.xlane.xlu0 %983
    %985 = vadd.xlane.f32.xlu0 %v730
    %v986 = vpop.xlane.xlu0 %985
    %987 = vadd.xlane.f32.xlu0 %v732
    %v988 = vpop.xlane.xlu0 %987
    %989 = vadd.xlane.f32.xlu0 %v734
    %v990 = vpop.xlane.xlu0 %989
    %991 = vadd.xlane.f32.xlu0 %v736
    %v992 = vpop.xlane.xlu0 %991
    %993 = vadd.xlane.f32.xlu0 %v738
    %v994 = vpop.xlane.xlu0 %993
    %995 = vadd.xlane.f32.xlu0 %v740
    %v996 = vpop.xlane.xlu0 %995
    %997 = vadd.xlane.f32.xlu0 %v742
    %v998 = vpop.xlane.xlu0 %997
    %999 = vadd.xlane.f32.xlu0 %v744
    %v1000 = vpop.xlane.xlu0 %999
    %1001 = vadd.xlane.f32.xlu0 %v746
    %v1002 = vpop.xlane.xlu0 %1001
    %1003 = vadd.xlane.f32.xlu0 %v748
    %v1004 = vpop.xlane.xlu0 %1003
    %1005 = vadd.xlane.f32.xlu0 %v750
    %v1006 = vpop.xlane.xlu0 %1005
    %1007 = vadd.xlane.f32.xlu0 %v752
    %v1008 = vpop.xlane.xlu0 %1007
    %1009 = vadd.xlane.f32.xlu0 %v754
    %v1010 = vpop.xlane.xlu0 %1009
    %1011 = vadd.xlane.f32.xlu0 %v756
    %v1012 = vpop.xlane.xlu0 %1011
    %1013 = vadd.xlane.f32.xlu0 %v758
    %v1014 = vpop.xlane.xlu0 %1013
    %1015 = vadd.xlane.f32.xlu0 %v760
    %v1016 = vpop.xlane.xlu0 %1015
    %1017 = vadd.xlane.f32.xlu0 %v762
    %v1018 = vpop.xlane.xlu0 %1017
    %1019 = vadd.xlane.f32.xlu0 %v764
    %v1020 = vpop.xlane.xlu0 %1019
    %1021 = vadd.xlane.f32.xlu0 %v766
    %v1022 = vpop.xlane.xlu0 %1021
    %1023 = vadd.xlane.f32.xlu0 %v768
    %v1024 = vpop.xlane.xlu0 %1023
    %1025 = vadd.xlane.f32.xlu0 %v770
    %v1026 = vpop.xlane.xlu0 %1025
    %1027 = vadd.xlane.f32.xlu0 %v772
    %v1028 = vpop.xlane.xlu0 %1027
    %1029 = vadd.xlane.f32.xlu0 %v774
    %v1030 = vpop.xlane.xlu0 %1029
    %1031 = vadd.xlane.f32.xlu0 %v776
    %v1032 = vpop.xlane.xlu0 %1031
    %1033 = vadd.xlane.f32.xlu0 %v778
    %v1034 = vpop.xlane.xlu0 %1033
    %1035 = vadd.xlane.f32.xlu0 %v780
    %v1036 = vpop.xlane.xlu0 %1035
    %1037 = vadd.xlane.f32.xlu0 %v782
    %v1038 = vpop.xlane.xlu0 %1037
    %1039 = vadd.xlane.f32.xlu0 %v784
    %v1040 = vpop.xlane.xlu0 %1039
    %1041 = vadd.xlane.f32.xlu0 %v786
    %v1042 = vpop.xlane.xlu0 %1041
    %1043 = vadd.xlane.f32.xlu0 %v788
    %v1044 = vpop.xlane.xlu0 %1043
    %1045 = vadd.xlane.f32.xlu0 %v790
    %v1046 = vpop.xlane.xlu0 %1045
    %v1047 = vrcp.pop %v792
    %v1048 = vrcp.pop %v794
    %v1049 = vrcp.pop %v796
    %v1050 = vrcp.pop %v798
    %v1051 = vrcp.pop %v800
    %v1052 = vrcp.pop %v802
    %v1053 = vrcp.pop %v804
    %v1054 = vrcp.pop %v806
    %v1055 = vrcp.pop %v808
    %v1056 = vrcp.pop %v810
    %v1057 = vrcp.pop %v812
    %v1058 = vrcp.pop %v814
    %v1059 = vrcp.pop %v816
    %v1060 = vrcp.pop %v818
    %v1061 = vrcp.pop %v820
    %v1062 = vrcp.pop %v822
    %v1063 = vrcp.pop %v824
    %v1064 = vrcp.pop %v826
    %v1065 = vrcp.pop %v828
    %v1066 = vrcp.pop %v830
    %v1067 = vrcp.pop %v832
    %v1068 = vrcp.pop %v834
    %v1069 = vrcp.pop %v836
    %v1070 = vrcp.pop %v838
    %v1071 = vrcp.pop %v840
    %v1072 = vrcp.pop %v842
    %v1073 = vrcp.pop %v844
    %v1074 = vrcp.pop %v846
    %v1075 = vrcp.pop %v848
    %v1076 = vrcp.pop %v850
    %v1077 = vrcp.pop %v852
    %v1078 = vrcp.pop %v854
    %v1079 = vrcp.pop %v856
    %v1080 = vrcp.pop %v858
    %v1081 = vrcp.pop %v860
    %v1082 = vrcp.pop %v862
    %v1083 = vrcp.pop %v864
    %v1084 = vrcp.pop %v866
    %v1085 = vrcp.pop %v868
    %v1086 = vrcp.pop %v870
    %v1087 = vrcp.pop %v872
    %v1088 = vrcp.pop %v874
    %v1089 = vrcp.pop %v876
    %v1090 = vrcp.pop %v878
    %v1091 = vrcp.pop %v880
    %v1092 = vrcp.pop %v882
    %v1093 = vrcp.pop %v884
    %v1094 = vrcp.pop %v886
    %v1095 = vrcp.pop %v888
    %v1096 = vrcp.pop %v890
    %v1097 = vrcp.pop %v892
    %v1098 = vrcp.pop %v894
    %v1099 = vrcp.pop %v896
    %v1100 = vrcp.pop %v898
    %v1101 = vrcp.pop %v900
    %v1102 = vrcp.pop %v902
    %v1103 = vrcp.pop %v904
    %v1104 = vrcp.pop %v906
    %v1105 = vrcp.pop %v908
    %v1106 = vrcp.pop %v910
    %v1107 = vrcp.pop %v912
    %v1108 = vrcp.pop %v914
    %v1109 = vrcp.pop %v916
    %v1110 = vrcp.pop %v918
    %v1111 = vrcp.pop %v920
    %v1112 = vrcp.pop %v922
    %v1113 = vrcp.pop %v924
    %v1114 = vrcp.pop %v926
    %v1115 = vrcp.pop %v928
    %v1116 = vrcp.pop %v930
    %v1117 = vrcp.pop %v932
    %v1118 = vrcp.pop %v934
    %v1119 = vrcp.pop %v936
    %v1120 = vrcp.pop %v938
    %v1121 = vrcp.pop %v940
    %v1122 = vrcp.pop %v942
    %v1123 = vrcp.pop %v944
    %v1124 = vrcp.pop %v946
    %v1125 = vrcp.pop %v948
    %v1126 = vrcp.pop %v950
    %v1127 = vrcp.pop %v952
    %v1128 = vrcp.pop %v954
    %v1129 = vrcp.pop %v956
    %v1130 = vrcp.pop %v958
    %v1131 = vrcp.pop %v960
    %v1132 = vrcp.pop %v962
    %v1133 = vrcp.pop %v964
    %v1134 = vrcp.pop %v966
    %v1135 = vrcp.pop %v968
    %v1136 = vrcp.pop %v970
    %v1137 = vrcp.pop %v972
    %v1138 = vrcp.pop %v974
    %v1139 = vrcp.pop %v976
    %v1140 = vrcp.pop %v978
    %v1141 = vrcp.pop %v980
    %v1142 = vrcp.pop %v982
    %v1143 = vrcp.pop %v984
    %v1144 = vrcp.pop %v986
    %v1145 = vrcp.pop %v988
    %v1146 = vrcp.pop %v990
    %v1147 = vrcp.pop %v992
    %v1148 = vrcp.pop %v994
    %v1149 = vrcp.pop %v996
    %v1150 = vrcp.pop %v998
    %v1151 = vrcp.pop %v1000
    %v1152 = vrcp.pop %v1002
    %v1153 = vrcp.pop %v1004
    %v1154 = vrcp.pop %v1006
    %v1155 = vrcp.pop %v1008
    %v1156 = vrcp.pop %v1010
    %v1157 = vrcp.pop %v1012
    %v1158 = vrcp.pop %v1014
    %v1159 = vrcp.pop %v1016
    %v1160 = vrcp.pop %v1018
    %v1161 = vrcp.pop %v1020
    %v1162 = vrcp.pop %v1022
    %v1163 = vrcp.pop %v1024
    %v1164 = vrcp.pop %v1026
    %v1165 = vrcp.pop %v1028
    %v1166 = vrcp.pop %v1030
    %v1167 = vrcp.pop %v1032
    %v1168 = vrcp.pop %v1034
    %v1169 = vrcp.pop %v1036
    %v1170 = vrcp.pop %v1038
    %v1171 = vrcp.pop %v1040
    %v1172 = vrcp.pop %v1042
    %v1173 = vrcp.pop %v1044
    %v1174 = vrcp.pop %v1046
    %v1175 = vmul.f32 %v536, %v1047
    %v1176 = vmul.f32 %v538, %v1048
    %v1177 = vmul.f32 %v540, %v1049
    %v1178 = vmul.f32 %v542, %v1050
    %v1179 = vmul.f32 %v544, %v1051
    %v1180 = vmul.f32 %v546, %v1052
    %v1181 = vmul.f32 %v548, %v1053
    %v1182 = vmul.f32 %v550, %v1054
    %v1183 = vmul.f32 %v552, %v1055
    %v1184 = vmul.f32 %v554, %v1056
    %v1185 = vmul.f32 %v556, %v1057
    %v1186 = vmul.f32 %v558, %v1058
    %v1187 = vmul.f32 %v560, %v1059
    %v1188 = vmul.f32 %v562, %v1060
    %v1189 = vmul.f32 %v564, %v1061
    %v1190 = vmul.f32 %v566, %v1062
    %v1191 = vmul.f32 %v568, %v1063
    %v1192 = vmul.f32 %v570, %v1064
    %v1193 = vmul.f32 %v572, %v1065
    %v1194 = vmul.f32 %v574, %v1066
    %v1195 = vmul.f32 %v576, %v1067
    %v1196 = vmul.f32 %v578, %v1068
    %v1197 = vmul.f32 %v580, %v1069
    %v1198 = vmul.f32 %v582, %v1070
    %v1199 = vmul.f32 %v584, %v1071
    %v1200 = vmul.f32 %v586, %v1072
    %v1201 = vmul.f32 %v588, %v1073
    %v1202 = vmul.f32 %v590, %v1074
    %v1203 = vmul.f32 %v592, %v1075
    %v1204 = vmul.f32 %v594, %v1076
    %v1205 = vmul.f32 %v596, %v1077
    %v1206 = vmul.f32 %v598, %v1078
    %v1207 = vmul.f32 %v600, %v1079
    %v1208 = vmul.f32 %v602, %v1080
    %v1209 = vmul.f32 %v604, %v1081
    %v1210 = vmul.f32 %v606, %v1082
    %v1211 = vmul.f32 %v608, %v1083
    %v1212 = vmul.f32 %v610, %v1084
    %v1213 = vmul.f32 %v612, %v1085
    %v1214 = vmul.f32 %v614, %v1086
    %v1215 = vmul.f32 %v616, %v1087
    %v1216 = vmul.f32 %v618, %v1088
    %v1217 = vmul.f32 %v620, %v1089
    %v1218 = vmul.f32 %v622, %v1090
    %v1219 = vmul.f32 %v624, %v1091
    %v1220 = vmul.f32 %v626, %v1092
    %v1221 = vmul.f32 %v628, %v1093
    %v1222 = vmul.f32 %v630, %v1094
    %v1223 = vmul.f32 %v632, %v1095
    %v1224 = vmul.f32 %v634, %v1096
    %v1225 = vmul.f32 %v636, %v1097
    %v1226 = vmul.f32 %v638, %v1098
    %v1227 = vmul.f32 %v640, %v1099
    %v1228 = vmul.f32 %v642, %v1100
    %v1229 = vmul.f32 %v644, %v1101
    %v1230 = vmul.f32 %v646, %v1102
    %v1231 = vmul.f32 %v648, %v1103
    %v1232 = vmul.f32 %v650, %v1104
    %v1233 = vmul.f32 %v652, %v1105
    %v1234 = vmul.f32 %v654, %v1106
    %v1235 = vmul.f32 %v656, %v1107
    %v1236 = vmul.f32 %v658, %v1108
    %v1237 = vmul.f32 %v660, %v1109
    %v1238 = vmul.f32 %v662, %v1110
    %v1239 = vmul.f32 %v664, %v1111
    %v1240 = vmul.f32 %v666, %v1112
    %v1241 = vmul.f32 %v668, %v1113
    %v1242 = vmul.f32 %v670, %v1114
    %v1243 = vmul.f32 %v672, %v1115
    %v1244 = vmul.f32 %v674, %v1116
    %v1245 = vmul.f32 %v676, %v1117
    %v1246 = vmul.f32 %v678, %v1118
    %v1247 = vmul.f32 %v680, %v1119
    %v1248 = vmul.f32 %v682, %v1120
    %v1249 = vmul.f32 %v684, %v1121
    %v1250 = vmul.f32 %v686, %v1122
    %v1251 = vmul.f32 %v688, %v1123
    %v1252 = vmul.f32 %v690, %v1124
    %v1253 = vmul.f32 %v692, %v1125
    %v1254 = vmul.f32 %v694, %v1126
    %v1255 = vmul.f32 %v696, %v1127
    %v1256 = vmul.f32 %v698, %v1128
    %v1257 = vmul.f32 %v700, %v1129
    %v1258 = vmul.f32 %v702, %v1130
    %v1259 = vmul.f32 %v704, %v1131
    %v1260 = vmul.f32 %v706, %v1132
    %v1261 = vmul.f32 %v708, %v1133
    %v1262 = vmul.f32 %v710, %v1134
    %v1263 = vmul.f32 %v712, %v1135
    %v1264 = vmul.f32 %v714, %v1136
    %v1265 = vmul.f32 %v716, %v1137
    %v1266 = vmul.f32 %v718, %v1138
    %v1267 = vmul.f32 %v720, %v1139
    %v1268 = vmul.f32 %v722, %v1140
    %v1269 = vmul.f32 %v724, %v1141
    %v1270 = vmul.f32 %v726, %v1142
    %v1271 = vmul.f32 %v728, %v1143
    %v1272 = vmul.f32 %v730, %v1144
    %v1273 = vmul.f32 %v732, %v1145
    %v1274 = vmul.f32 %v734, %v1146
    %v1275 = vmul.f32 %v736, %v1147
    %v1276 = vmul.f32 %v738, %v1148
    %v1277 = vmul.f32 %v740, %v1149
    %v1278 = vmul.f32 %v742, %v1150
    %v1279 = vmul.f32 %v744, %v1151
    %v1280 = vmul.f32 %v746, %v1152
    %v1281 = vmul.f32 %v748, %v1153
    %v1282 = vmul.f32 %v750, %v1154
    %v1283 = vmul.f32 %v752, %v1155
    %v1284 = vmul.f32 %v754, %v1156
    %v1285 = vmul.f32 %v756, %v1157
    %v1286 = vmul.f32 %v758, %v1158
    %v1287 = vmul.f32 %v760, %v1159
    %v1288 = vmul.f32 %v762, %v1160
    %v1289 = vmul.f32 %v764, %v1161
    %v1290 = vmul.f32 %v766, %v1162
    %v1291 = vmul.f32 %v768, %v1163
    %v1292 = vmul.f32 %v770, %v1164
    %v1293 = vmul.f32 %v772, %v1165
    %v1294 = vmul.f32 %v774, %v1166
    %v1295 = vmul.f32 %v776, %v1167
    %v1296 = vmul.f32 %v778, %v1168
    %v1297 = vmul.f32 %v780, %v1169
    %v1298 = vmul.f32 %v782, %v1170
    %v1299 = vmul.f32 %v784, %v1171
    %v1300 = vmul.f32 %v786, %v1172
    %v1301 = vmul.f32 %v788, %v1173
    %v1302 = vmul.f32 %v790, %v1174
    %1303 = vst [vmem:[#allocation5] sm:$0xff] %v1175
    %1304 = vst [vmem:[#allocation5 + $0x8] sm:$0xff] %v1176
    %1305 = vst [vmem:[#allocation5 + $0x10] sm:$0xff] %v1177
    %1306 = vst [vmem:[#allocation5 + $0x18] sm:$0xff] %v1178
    %1307 = vst [vmem:[#allocation5 + $0x20] sm:$0xff] %v1179
    %1308 = vst [vmem:[#allocation5 + $0x28] sm:$0xff] %v1180
    %1309 = vst [vmem:[#allocation5 + $0x30] sm:$0xff] %v1181
    %1310 = vst [vmem:[#allocation5 + $0x38] sm:$0xff] %v1182
    %1311 = vst [vmem:[#allocation5 + $0x40] sm:$0xff] %v1183
    %1312 = vst [vmem:[#allocation5 + $0x48] sm:$0xff] %v1184
    %1313 = vst [vmem:[#allocation5 + $0x50] sm:$0xff] %v1185
    %1314 = vst [vmem:[#allocation5 + $0x58] sm:$0xff] %v1186
    %1315 = vst [vmem:[#allocation5 + $0x60] sm:$0xff] %v1187
    %1316 = vst [vmem:[#allocation5 + $0x68] sm:$0xff] %v1188
    %1317 = vst [vmem:[#allocation5 + $0x70] sm:$0xff] %v1189
    %1318 = vst [vmem:[#allocation5 + $0x78] sm:$0xff] %v1190
    %1319 = vst [vmem:[#allocation5 + $0x80] sm:$0xff] %v1191
    %1320 = vst [vmem:[#allocation5 + $0x88] sm:$0xff] %v1192
    %1321 = vst [vmem:[#allocation5 + $0x90] sm:$0xff] %v1193
    %1322 = vst [vmem:[#allocation5 + $0x98] sm:$0xff] %v1194
    %1323 = vst [vmem:[#allocation5 + $0xa0] sm:$0xff] %v1195
    %1324 = vst [vmem:[#allocation5 + $0xa8] sm:$0xff] %v1196
    %1325 = vst [vmem:[#allocation5 + $0xb0] sm:$0xff] %v1197
    %1326 = vst [vmem:[#allocation5 + $0xb8] sm:$0xff] %v1198
    %1327 = vst [vmem:[#allocation5 + $0xc0] sm:$0xff] %v1199
    %1328 = vst [vmem:[#allocation5 + $0xc8] sm:$0xff] %v1200
    %1329 = vst [vmem:[#allocation5 + $0xd0] sm:$0xff] %v1201
    %1330 = vst [vmem:[#allocation5 + $0xd8] sm:$0xff] %v1202
    %1331 = vst [vmem:[#allocation5 + $0xe0] sm:$0xff] %v1203
    %1332 = vst [vmem:[#allocation5 + $0xe8] sm:$0xff] %v1204
    %1333 = vst [vmem:[#allocation5 + $0xf0] sm:$0xff] %v1205
    %1334 = vst [vmem:[#allocation5 + $0xf8] sm:$0xff] %v1206
    %1335 = vst [vmem:[#allocation5 + $0x100] sm:$0xff] %v1207
    %1336 = vst [vmem:[#allocation5 + $0x108] sm:$0xff] %v1208
    %1337 = vst [vmem:[#allocation5 + $0x110] sm:$0xff] %v1209
    %1338 = vst [vmem:[#allocation5 + $0x118] sm:$0xff] %v1210
    %1339 = vst [vmem:[#allocation5 + $0x120] sm:$0xff] %v1211
    %1340 = vst [vmem:[#allocation5 + $0x128] sm:$0xff] %v1212
    %1341 = vst [vmem:[#allocation5 + $0x130] sm:$0xff] %v1213
    %1342 = vst [vmem:[#allocation5 + $0x138] sm:$0xff] %v1214
    %1343 = vst [vmem:[#allocation5 + $0x140] sm:$0xff] %v1215
    %1344 = vst [vmem:[#allocation5 + $0x148] sm:$0xff] %v1216
    %1345 = vst [vmem:[#allocation5 + $0x150] sm:$0xff] %v1217
    %1346 = vst [vmem:[#allocation5 + $0x158] sm:$0xff] %v1218
    %1347 = vst [vmem:[#allocation5 + $0x160] sm:$0xff] %v1219
    %1348 = vst [vmem:[#allocation5 + $0x168] sm:$0xff] %v1220
    %1349 = vst [vmem:[#allocation5 + $0x170] sm:$0xff] %v1221
    %1350 = vst [vmem:[#allocation5 + $0x178] sm:$0xff] %v1222
    %1351 = vst [vmem:[#allocation5 + $0x180] sm:$0xff] %v1223
    %1352 = vst [vmem:[#allocation5 + $0x188] sm:$0xff] %v1224
    %1353 = vst [vmem:[#allocation5 + $0x190] sm:$0xff] %v1225
    %1354 = vst [vmem:[#allocation5 + $0x198] sm:$0xff] %v1226
    %1355 = vst [vmem:[#allocation5 + $0x1a0] sm:$0xff] %v1227
    %1356 = vst [vmem:[#allocation5 + $0x1a8] sm:$0xff] %v1228
    %1357 = vst [vmem:[#allocation5 + $0x1b0] sm:$0xff] %v1229
    %1358 = vst [vmem:[#allocation5 + $0x1b8] sm:$0xff] %v1230
    %1359 = vst [vmem:[#allocation5 + $0x1c0] sm:$0xff] %v1231
    %1360 = vst [vmem:[#allocation5 + $0x1c8] sm:$0xff] %v1232
    %1361 = vst [vmem:[#allocation5 + $0x1d0] sm:$0xff] %v1233
    %1362 = vst [vmem:[#allocation5 + $0x1d8] sm:$0xff] %v1234
    %1363 = vst [vmem:[#allocation5 + $0x1e0] sm:$0xff] %v1235
    %1364 = vst [vmem:[#allocation5 + $0x1e8] sm:$0xff] %v1236
    %1365 = vst [vmem:[#allocation5 + $0x1f0] sm:$0xff] %v1237
    %1366 = vst [vmem:[#allocation5 + $0x1f8] sm:$0xff] %v1238
    %1367 = vst [vmem:[#allocation5 + $0x200] sm:$0xff] %v1239
    %1368 = vst [vmem:[#allocation5 + $0x208] sm:$0xff] %v1240
    %1369 = vst [vmem:[#allocation5 + $0x210] sm:$0xff] %v1241
    %1370 = vst [vmem:[#allocation5 + $0x218] sm:$0xff] %v1242
    %1371 = vst [vmem:[#allocation5 + $0x220] sm:$0xff] %v1243
    %1372 = vst [vmem:[#allocation5 + $0x228] sm:$0xff] %v1244
    %1373 = vst [vmem:[#allocation5 + $0x230] sm:$0xff] %v1245
    %1374 = vst [vmem:[#allocation5 + $0x238] sm:$0xff] %v1246
    %1375 = vst [vmem:[#allocation5 + $0x240] sm:$0xff] %v1247
    %1376 = vst [vmem:[#allocation5 + $0x248] sm:$0xff] %v1248
    %1377 = vst [vmem:[#allocation5 + $0x250] sm:$0xff] %v1249
    %1378 = vst [vmem:[#allocation5 + $0x258] sm:$0xff] %v1250
    %1379 = vst [vmem:[#allocation5 + $0x260] sm:$0xff] %v1251
    %1380 = vst [vmem:[#allocation5 + $0x268] sm:$0xff] %v1252
    %1381 = vst [vmem:[#allocation5 + $0x270] sm:$0xff] %v1253
    %1382 = vst [vmem:[#allocation5 + $0x278] sm:$0xff] %v1254
    %1383 = vst [vmem:[#allocation5 + $0x280] sm:$0xff] %v1255
    %1384 = vst [vmem:[#allocation5 + $0x288] sm:$0xff] %v1256
    %1385 = vst [vmem:[#allocation5 + $0x290] sm:$0xff] %v1257
    %1386 = vst [vmem:[#allocation5 + $0x298] sm:$0xff] %v1258
    %1387 = vst [vmem:[#allocation5 + $0x2a0] sm:$0xff] %v1259
    %1388 = vst [vmem:[#allocation5 + $0x2a8] sm:$0xff] %v1260
    %1389 = vst [vmem:[#allocation5 + $0x2b0] sm:$0xff] %v1261
    %1390 = vst [vmem:[#allocation5 + $0x2b8] sm:$0xff] %v1262
    %1391 = vst [vmem:[#allocation5 + $0x2c0] sm:$0xff] %v1263
    %1392 = vst [vmem:[#allocation5 + $0x2c8] sm:$0xff] %v1264
    %1393 = vst [vmem:[#allocation5 + $0x2d0] sm:$0xff] %v1265
    %1394 = vst [vmem:[#allocation5 + $0x2d8] sm:$0xff] %v1266
    %1395 = vst [vmem:[#allocation5 + $0x2e0] sm:$0xff] %v1267
    %1396 = vst [vmem:[#allocation5 + $0x2e8] sm:$0xff] %v1268
    %1397 = vst [vmem:[#allocation5 + $0x2f0] sm:$0xff] %v1269
    %1398 = vst [vmem:[#allocation5 + $0x2f8] sm:$0xff] %v1270
    %1399 = vst [vmem:[#allocation5 + $0x300] sm:$0xff] %v1271
    %1400 = vst [vmem:[#allocation5 + $0x308] sm:$0xff] %v1272
    %1401 = vst [vmem:[#allocation5 + $0x310] sm:$0xff] %v1273
    %1402 = vst [vmem:[#allocation5 + $0x318] sm:$0xff] %v1274
    %1403 = vst [vmem:[#allocation5 + $0x320] sm:$0xff] %v1275
    %1404 = vst [vmem:[#allocation5 + $0x328] sm:$0xff] %v1276
    %1405 = vst [vmem:[#allocation5 + $0x330] sm:$0xff] %v1277
    %1406 = vst [vmem:[#allocation5 + $0x338] sm:$0xff] %v1278
    %1407 = vst [vmem:[#allocation5 + $0x340] sm:$0xff] %v1279
    %1408 = vst [vmem:[#allocation5 + $0x348] sm:$0xff] %v1280
    %1409 = vst [vmem:[#allocation5 + $0x350] sm:$0xff] %v1281
    %1410 = vst [vmem:[#allocation5 + $0x358] sm:$0xff] %v1282
    %1411 = vst [vmem:[#allocation5 + $0x360] sm:$0xff] %v1283
    %1412 = vst [vmem:[#allocation5 + $0x368] sm:$0xff] %v1284
    %1413 = vst [vmem:[#allocation5 + $0x370] sm:$0xff] %v1285
    %1414 = vst [vmem:[#allocation5 + $0x378] sm:$0xff] %v1286
    %1415 = vst [vmem:[#allocation5 + $0x380] sm:$0xff] %v1287
    %1416 = vst [vmem:[#allocation5 + $0x388] sm:$0xff] %v1288
    %1417 = vst [vmem:[#allocation5 + $0x390] sm:$0xff] %v1289
    %1418 = vst [vmem:[#allocation5 + $0x398] sm:$0xff] %v1290
    %1419 = vst [vmem:[#allocation5 + $0x3a0] sm:$0xff] %v1291
    %1420 = vst [vmem:[#allocation5 + $0x3a8] sm:$0xff] %v1292
    %1421 = vst [vmem:[#allocation5 + $0x3b0] sm:$0xff] %v1293
    %1422 = vst [vmem:[#allocation5 + $0x3b8] sm:$0xff] %v1294
    %1423 = vst [vmem:[#allocation5 + $0x3c0] sm:$0xff] %v1295
    %1424 = vst [vmem:[#allocation5 + $0x3c8] sm:$0xff] %v1296
    %1425 = vst [vmem:[#allocation5 + $0x3d0] sm:$0xff] %v1297
    %1426 = vst [vmem:[#allocation5 + $0x3d8] sm:$0xff] %v1298
    %1427 = vst [vmem:[#allocation5 + $0x3e0] sm:$0xff] %v1299
    %1428 = vst [vmem:[#allocation5 + $0x3e8] sm:$0xff] %v1300
    %1429 = vst [vmem:[#allocation5 + $0x3f0] sm:$0xff] %v1301
    %1430 = vst [vmem:[#allocation5 + $0x3f8] sm:$0xff] %v1302
    // Predicated region
    $region10: #{tpu_custom_call.1} parent=1 // pred_check
      _
    $region11: #{tpu_custom_call.1} parent=1 // pred_check_branch
      %1432 = sbr.rel (0) target = $region13
    $region12: #{tpu_custom_call.1} parent=1 // pred_region
      %s1434 = ssub.s32 16384, 16384
      %1435 = vsyncadd [#allocation4], %s1434
      %s1436 = sshll.u32 [#allocation5], 4
      %s1437 = int_to_ptr.vmem [resolvable:$true] %s1436
      %1442 = dma.vmem_to_hbm [thread:$0]  %s1437, 16384, %s1, [#allocation4], 128, 128, 8
    $region13: #{tpu_custom_call.1} parent=1 // pred_fallthru
      _
    // Predicated region
    $region14: #{tpu_custom_call.1} parent=1 // pred_check
      _
    $region15: #{tpu_custom_call.1} parent=1 // pred_check_branch
      %1444 = sbr.rel (0) target = $region17
    $region16: #{tpu_custom_call.1} parent=1 // pred_region
      %1445 = dma.done [#allocation4], 16384
    $region17: #{tpu_custom_call.1} parent=1 // pred_fallthru
      _
    %1446 = vsyncpa [#allocation3], 1
    %1447 = vsyncpa [#allocation4], 1

</llo_original>
